<compile_context>
chip_gen: v7x
topology: tpu7x:2x2x1
jax: 0.10.0
libtpu: 0.0.40
codegen_flags: <defaults>
</compile_context>

<pallas_src>
import jax
import jax.numpy as jnp
from jax.experimental import pallas as pl
from jax.experimental.pallas import tpu as pltpu


# ----------------------------- kernel ---------------------------------------

def seq_meta_kernel(x_ref, meta_ref,
                    w1_ref, b1_ref,
                    w2_ref, b2_ref,
                    w3_ref, b3_ref,
                    o_ref):
    """One batch-tile of the fused chained forward pass.

    Weights are bf16 (MXU-native); accumulation, bias add, activation and the
    metadata scaling are f32.  meta_ref is a (1,1) SMEM scalar.
    """
    scale = meta_ref[0, 0]                      # metadata passed to every layer

    # In-kernel cast of the x tile: no separate HBM->HBM convert pass in the
    # wrapper; the cast is VPU filler hidden under the MXU/DMA critical path.
    x = x_ref[...].astype(jnp.bfloat16)

    # layer 1: relu(x @ W1 + b1) * scale
    h = jnp.dot(x, w1_ref[...],
                preferred_element_type=jnp.float32) + b1_ref[...]
    h = jnp.maximum(h, 0.0) * scale

    # layer 2: relu(h @ W2 + b2) * scale
    h = jnp.dot(h.astype(jnp.bfloat16), w2_ref[...],
                preferred_element_type=jnp.float32) + b2_ref[...]
    h = jnp.maximum(h, 0.0) * scale

    # layer 3: h @ W3 + b3   (plain linear head; metadata unused by this layer)
    h = jnp.dot(h.astype(jnp.bfloat16), w3_ref[...],
                preferred_element_type=jnp.float32) + b3_ref[...]

    o_ref[...] = h.astype(o_ref.dtype)


# ----------------------------- helpers ---------------------------------------

def prepare_sequential_meta_params(params):
    """One-time parameter prep (call OUTSIDE the hot path).

    Weights -> bf16 (MXU operands), biases -> f32 row vectors (1, N).
    """
    return tuple(
        (jnp.asarray(w, jnp.bfloat16), jnp.asarray(b, jnp.float32).reshape(1, -1))
        for (w, b) in params
    )


def _tpu_hw():
    """(physical VMEM bytes per core, is dual-TensorCore chip)."""
    kind = ""
    try:
        kind = jax.devices()[0].device_kind.lower()
    except Exception:
        pass
    dual_tc = "v7" in kind
    phys_vmem = (64 if dual_tc else 128) * 2**20
    try:
        info = pltpu.get_tpu_info()
        v = getattr(info, "vmem_capacity_bytes", None)
        if v:
            phys_vmem = int(v)
            dual_tc = dual_tc or phys_vmem <= 64 * 2**20
    except Exception:
        pass
    return phys_vmem, dual_tc


def _pick_tile_m(B, dual_tc):
    """Batch-tile heuristic (mem-bound regime: prefer the biggest tile)."""
    def largest_divisor(limit):
        limit = max(1, min(B, limit))
        for t in range(limit, 0, -1):
            if B % t == 0 and (t % 8 == 0 or t == B):
                return t
        return B

    # 512-row tiles already reach >=85% of the HBM roofline; fewer grid steps
    # means less fixed per-step overhead.  Single-TC v5e/v6e never split.
    tile = largest_divisor(512)

    # v7x only: shard the batch across the two TensorCores, but never let a
    # tile drop below 256 rows (keeps the 256-wide MXU full and hides MXU
    # result-buffer drain between the three serially dependent matmuls).
    if dual_tc and B // tile < 2:
        half = largest_divisor(max(256, B // 2))
        if half >= 256 and B // half >= 2:
            tile = half
    return tile


def _vmem_budget_bytes(tile_m, D, H, D_out, x_bytes, out_bytes):
    """Rough resident-VMEM estimate used to set vmem_limit_bytes."""
    bf16, f32 = 2, 4
    # single-buffered weights/biases (pl.Buffered(1))
    weights = (D * H + H * H + H * D_out) * bf16 + (2 * H + D_out) * f32
    # double-buffered x tile (caller dtype) and output tile (out dtype)
    acts = 2 * tile_m * D * x_bytes + 2 * tile_m * D_out * out_bytes
    # in-kernel live intermediates (f32 accumulators + bf16 recasts)
    scratch = 4 * tile_m * max(H, D_out) * f32
    return weights + acts + scratch


# ----------------------------- wrapper ---------------------------------------

def sequential_meta_forward(x, meta, params, *, tile_m=None, out_dtype=None):
    """Fused 3-layer SequentialMeta chain.  `params` should come from
    prepare_sequential_meta_params() (the in-wrapper asarray calls below are
    no-ops in that case, so no per-call weight convert traffic is emitted)."""
    (w1, b1), (w2, b2), (w3, b3) = params
    B, D = x.shape
    H = w1.shape[1]
    D_out = w3.shape[1]
    out_dtype = x.dtype if out_dtype is None else jnp.dtype(out_dtype)

    # Safety net only: no-ops when params are already prepared.
    w1, w2, w3 = (jnp.asarray(w, jnp.bfloat16) for w in (w1, w2, w3))
    b1, b2, b3 = (jnp.asarray(b, jnp.float32).reshape(1, -1) for b in (b1, b2, b3))
    meta_c = jnp.asarray(meta, jnp.float32).reshape(1, 1)

    phys_vmem, dual_tc = _tpu_hw()

    if tile_m is None:
        tile_m = _pick_tile_m(B, dual_tc)
    assert B % tile_m == 0, "batch must be divisible by tile_m"
    assert tile_m % 8 == 0 or tile_m == B, "tile_m must respect (8,128) sublane tiling"

    # ~22% headroom below physical VMEM for Mosaic internal scratch:
    # v7x (64 MiB) -> ~50 MiB scoped, v5e/v6e (128 MiB) -> ~100 MiB scoped.
    vmem_cap = int(phys_vmem * 0.78)
    budget = _vmem_budget_bytes(tile_m, D, H, D_out,
                                jnp.dtype(x.dtype).itemsize,
                                jnp.dtype(out_dtype).itemsize)
    if budget > vmem_cap:
        # TODO(synk): add an N-tiled (hidden-dim) grid axis with an f32 VMEM
        # accumulator and pl.when init/finalize for configs whose resident
        # weights overflow VMEM (hits v7x's 64 MiB before v5e/v6e's 128 MiB).
        raise ValueError(
            f"resident footprint {budget/2**20:.1f} MiB exceeds the VMEM cap "
            f"{vmem_cap/2**20:.1f} MiB; reduce tile_m or add hidden-dim tiling")
    vmem_limit = int(min(vmem_cap, max(8 * 2**20, 2 * budget)))

    # grid-invariant weights/biases: single buffer, index_map always (0, 0)
    def wspec(shape):
        return pl.BlockSpec(shape, lambda i: (0, 0),
                            pipeline_mode=pl.Buffered(buffer_count=1))

    return pl.pallas_call(
        seq_meta_kernel,
        out_shape=jax.ShapeDtypeStruct((B, D_out), out_dtype),
        grid_spec=pltpu.PrefetchScalarGridSpec(
            num_scalar_prefetch=0,
            grid=(B // tile_m,),
            in_specs=[
                pl.BlockSpec((tile_m, D), lambda i: (i, 0)),              # x tile
                pl.BlockSpec((1, 1), lambda i: (0, 0),                    # metadata
                             memory_space=pltpu.MemorySpace.SMEM),
                wspec((D, H)), wspec((1, H)),                             # layer 1
                wspec((H, H)), wspec((1, H)),                             # layer 2
                wspec((H, D_out)), wspec((1, D_out)),                     # layer 3
            ],
            out_specs=pl.BlockSpec((tile_m, D_out), lambda i: (i, 0)),
        ),
        compiler_params=pltpu.CompilerParams(
            dimension_semantics=("parallel",),
            vmem_limit_bytes=vmem_limit),
    )(x, meta_c, w1, b1, w2, b2, w3, b3)


def sequential_meta_reference(x, meta, params):
    """Pure-JAX (f32) reference of the same chain, for correctness checking."""
    scale = jnp.asarray(meta, dtype=jnp.float32).reshape(())
    (w1, b1), (w2, b2), (w3, b3) = params
    h = x.astype(jnp.float32)
    h = jnp.maximum(h @ w1.astype(jnp.float32) + b1.astype(jnp.float32), 0.0) * scale
    h = jnp.maximum(h @ w2.astype(jnp.float32) + b2.astype(jnp.float32), 0.0) * scale
    h = h @ w3.astype(jnp.float32) + b3.astype(jnp.float32)
    return h.astype(x.dtype)


if __name__ == "__main__":
    key = jax.random.PRNGKey(0)
    kx, k1, k2, k3, kb1, kb2, kb3 = jax.random.split(key, 7)

    # small shapes: batch=64, width=128 (lane-dense output, no masked stores)
    B, D, H = 64, 128, 128
    x = jax.random.normal(kx, (B, D), dtype=jnp.float32)
    meta = jnp.array([[0.5]], dtype=jnp.float32)   # metadata scale passed to each layer

    params = (
        (jax.random.normal(k1, (D, H), dtype=jnp.float32) * 0.05,
         jax.random.normal(kb1, (1, H), dtype=jnp.float32) * 0.01),
        (jax.random.normal(k2, (H, H), dtype=jnp.float32) * 0.05,
         jax.random.normal(kb2, (1, H), dtype=jnp.float32) * 0.01),
        (jax.random.normal(k3, (H, D), dtype=jnp.float32) * 0.05,
         jax.random.normal(kb3, (1, D), dtype=jnp.float32) * 0.01),
    )

    # One-time parameter cast, outside the hot path.
    prepared = prepare_sequential_meta_params(params)

    out = sequential_meta_forward(x, meta, prepared)
    out = jax.block_until_ready(out)

    ref = sequential_meta_reference(x, meta, params)
    assert out.shape == (B, D)
    # bf16 MXU operands -> tolerance scaled for H=128 (tighter than before)
    max_err = float(jnp.max(jnp.abs(out.astype(jnp.float32) - ref.astype(jnp.float32))))
    assert jnp.allclose(out, ref, atol=3e-2, rtol=3e-2), \
        f"mismatch vs f32 reference (max abs err {max_err})"

    print("KERNEL_OK")
</pallas_src>

<mosaic_0001>
module attributes {stable_mosaic.version = 11 : i64} {
  func.func @seq_meta_kernel(%arg0: i32, %arg1: memref<64x128xf32, #tpu.memory_space<vmem>>, %arg2: memref<1x1xf32, #tpu.memory_space<smem>>, %arg3: memref<128x128xbf16, #tpu.memory_space<vmem>>, %arg4: memref<1x128xf32, #tpu.memory_space<vmem>>, %arg5: memref<128x128xbf16, #tpu.memory_space<vmem>>, %arg6: memref<1x128xf32, #tpu.memory_space<vmem>>, %arg7: memref<128x128xbf16, #tpu.memory_space<vmem>>, %arg8: memref<1x128xf32, #tpu.memory_space<vmem>>, %arg9: memref<64x128xf32, #tpu.memory_space<vmem>>) attributes {dimension_semantics = [#tpu.dimension_semantics<parallel>], iteration_bounds = array<i64: 1>, scalar_prefetch = 0 : i64, scratch_operands = 0 : i64, tpu.core_type = #tpu.core_type<tc>, window_params = [{transform_indices = @transform_0, window_bounds = array<i64: 64, 128>}, {transform_indices = @transform_1, window_bounds = array<i64: 1, 1>}, {pipeline_mode = #tpu.pipeline_mode<synchronous>, transform_indices = @transform_2, window_bounds = array<i64: 128, 128>}, {pipeline_mode = #tpu.pipeline_mode<synchronous>, transform_indices = @transform_3, window_bounds = array<i64: 1, 128>}, {pipeline_mode = #tpu.pipeline_mode<synchronous>, transform_indices = @transform_4, window_bounds = array<i64: 128, 128>}, {pipeline_mode = #tpu.pipeline_mode<synchronous>, transform_indices = @transform_5, window_bounds = array<i64: 1, 128>}, {pipeline_mode = #tpu.pipeline_mode<synchronous>, transform_indices = @transform_6, window_bounds = array<i64: 128, 128>}, {pipeline_mode = #tpu.pipeline_mode<synchronous>, transform_indices = @transform_7, window_bounds = array<i64: 1, 128>}, {transform_indices = @transform_8, window_bounds = array<i64: 64, 128>}]} {
    %c0 = arith.constant 0 : index
    %c0_0 = arith.constant 0 : index
    %0 = memref.load %arg2[%c0, %c0_0] : memref<1x1xf32, #tpu.memory_space<smem>>
    %c0_1 = arith.constant 0 : index
    %c0_2 = arith.constant 0 : index
    %1 = vector.load %arg1[%c0_1, %c0_2] : memref<64x128xf32, #tpu.memory_space<vmem>>, vector<64x128xf32>
    %2 = arith.truncf %1 : vector<64x128xf32> to vector<64x128xbf16>
    %c0_3 = arith.constant 0 : index
    %c0_4 = arith.constant 0 : index
    %3 = vector.load %arg3[%c0_3, %c0_4] : memref<128x128xbf16, #tpu.memory_space<vmem>>, vector<128x128xbf16>
    %cst = arith.constant dense<0.000000e+00> : vector<64x128xf32>
    %4 = tpu.matmul %2, %3, %cst {dimension_numbers = #tpu.dot_dimension_numbers<[1], [0], [0], [1], [0, 0, 1, 1], [], []>} : vector<64x128xbf16>, vector<128x128xbf16>, vector<64x128xf32> -> vector<64x128xf32>
    %c0_5 = arith.constant 0 : index
    %c0_6 = arith.constant 0 : index
    %5 = vector.load %arg4[%c0_5, %c0_6] : memref<1x128xf32, #tpu.memory_space<vmem>>, vector<1x128xf32>
    %6 = vector.broadcast %5 : vector<1x128xf32> to vector<64x128xf32>
    %7 = arith.addf %4, %6 : vector<64x128xf32>
    %cst_7 = arith.constant 0.000000e+00 : f32
    %8 = vector.broadcast %cst_7 : f32 to vector<64x128xf32>
    %9 = arith.maximumf %7, %8 : vector<64x128xf32>
    %10 = vector.broadcast %0 : f32 to vector<64x128xf32>
    %11 = arith.mulf %9, %10 : vector<64x128xf32>
    %12 = arith.truncf %11 : vector<64x128xf32> to vector<64x128xbf16>
    %c0_8 = arith.constant 0 : index
    %c0_9 = arith.constant 0 : index
    %13 = vector.load %arg5[%c0_8, %c0_9] : memref<128x128xbf16, #tpu.memory_space<vmem>>, vector<128x128xbf16>
    %cst_10 = arith.constant dense<0.000000e+00> : vector<64x128xf32>
    %14 = tpu.matmul %12, %13, %cst_10 {dimension_numbers = #tpu.dot_dimension_numbers<[1], [0], [0], [1], [0, 0, 1, 1], [], []>} : vector<64x128xbf16>, vector<128x128xbf16>, vector<64x128xf32> -> vector<64x128xf32>
    %c0_11 = arith.constant 0 : index
    %c0_12 = arith.constant 0 : index
    %15 = vector.load %arg6[%c0_11, %c0_12] : memref<1x128xf32, #tpu.memory_space<vmem>>, vector<1x128xf32>
    %16 = vector.broadcast %15 : vector<1x128xf32> to vector<64x128xf32>
    %17 = arith.addf %14, %16 : vector<64x128xf32>
    %cst_13 = arith.constant 0.000000e+00 : f32
    %18 = vector.broadcast %cst_13 : f32 to vector<64x128xf32>
    %19 = arith.maximumf %17, %18 : vector<64x128xf32>
    %20 = vector.broadcast %0 : f32 to vector<64x128xf32>
    %21 = arith.mulf %19, %20 : vector<64x128xf32>
    %22 = arith.truncf %21 : vector<64x128xf32> to vector<64x128xbf16>
    %c0_14 = arith.constant 0 : index
    %c0_15 = arith.constant 0 : index
    %23 = vector.load %arg7[%c0_14, %c0_15] : memref<128x128xbf16, #tpu.memory_space<vmem>>, vector<128x128xbf16>
    %cst_16 = arith.constant dense<0.000000e+00> : vector<64x128xf32>
    %24 = tpu.matmul %22, %23, %cst_16 {dimension_numbers = #tpu.dot_dimension_numbers<[1], [0], [0], [1], [0, 0, 1, 1], [], []>} : vector<64x128xbf16>, vector<128x128xbf16>, vector<64x128xf32> -> vector<64x128xf32>
    %c0_17 = arith.constant 0 : index
    %c0_18 = arith.constant 0 : index
    %25 = vector.load %arg8[%c0_17, %c0_18] : memref<1x128xf32, #tpu.memory_space<vmem>>, vector<1x128xf32>
    %26 = vector.broadcast %25 : vector<1x128xf32> to vector<64x128xf32>
    %27 = arith.addf %24, %26 : vector<64x128xf32>
    %c0_19 = arith.constant 0 : index
    %c0_20 = arith.constant 0 : index
    %28 = vector.load %arg9[%c0_19, %c0_20] : memref<64x128xf32, #tpu.memory_space<vmem>>, vector<64x128xf32>
    tpu.vector_store %arg9[%c0_19, %c0_20], %27 {strides = array<i32>} : memref<64x128xf32, #tpu.memory_space<vmem>>, vector<64x128xf32>,
    return
  }
  func.func @transform_0(%arg0: i32) -> (i32, i32) {
    %c0_i32 = arith.constant 0 : i32
    %c0_i32_0 = arith.constant 0 : i32
    return %arg0, %c0_i32 : i32, i32
  }
  func.func @transform_1(%arg0: i32) -> (i32, i32) {
    %c0_i32 = arith.constant 0 : i32
    %c0_i32_0 = arith.constant 0 : i32
    %c0_i32_1 = arith.constant 0 : i32
    return %c0_i32, %c0_i32_0 : i32, i32
  }
  func.func @transform_2(%arg0: i32) -> (i32, i32) {
    %c0_i32 = arith.constant 0 : i32
    %c0_i32_0 = arith.constant 0 : i32
    %c0_i32_1 = arith.constant 0 : i32
    return %c0_i32, %c0_i32_0 : i32, i32
  }
  func.func @transform_3(%arg0: i32) -> (i32, i32) {
    %c0_i32 = arith.constant 0 : i32
    %c0_i32_0 = arith.constant 0 : i32
    %c0_i32_1 = arith.constant 0 : i32
    return %c0_i32, %c0_i32_0 : i32, i32
  }
  func.func @transform_4(%arg0: i32) -> (i32, i32) {
    %c0_i32 = arith.constant 0 : i32
    %c0_i32_0 = arith.constant 0 : i32
    %c0_i32_1 = arith.constant 0 : i32
    return %c0_i32, %c0_i32_0 : i32, i32
  }
  func.func @transform_5(%arg0: i32) -> (i32, i32) {
    %c0_i32 = arith.constant 0 : i32
    %c0_i32_0 = arith.constant 0 : i32
    %c0_i32_1 = arith.constant 0 : i32
    return %c0_i32, %c0_i32_0 : i32, i32
  }
  func.func @transform_6(%arg0: i32) -> (i32, i32) {
    %c0_i32 = arith.constant 0 : i32
    %c0_i32_0 = arith.constant 0 : i32
    %c0_i32_1 = arith.constant 0 : i32
    return %c0_i32, %c0_i32_0 : i32, i32
  }
  func.func @transform_7(%arg0: i32) -> (i32, i32) {
    %c0_i32 = arith.constant 0 : i32
    %c0_i32_0 = arith.constant 0 : i32
    %c0_i32_1 = arith.constant 0 : i32
    return %c0_i32, %c0_i32_0 : i32, i32
  }
  func.func @transform_8(%arg0: i32) -> (i32, i32) {
    %c0_i32 = arith.constant 0 : i32
    %c0_i32_0 = arith.constant 0 : i32
    return %arg0, %c0_i32 : i32, i32
  }
}

</mosaic_0001>

<llo_original>
// kernel: tpu_custom_call.1
$region0: #{tpu_custom_call.1}
  #allocation0 [shape = 'u32[]', space=smem, size = 0x4, offset = 0x4, fixed_abs, tag = 'smem constant byte address 0x4 - core index']
  #allocation1 [shape = 'u32[144,128]{1,0:T(1,128)}', space=vmem, size = 0x12000, scoped, tag = 'internal scratch']
  #allocation2 [shape = 'f32[1,1]{1,0:T(1,128)S(6)}', space=smem, size = 0x200, scoped, tag = 'scoped memory for tpu_custom_call.1']
  %s0 = inlined_call_operand.hbm [shape: f32[64,128], index: 0, kind: input, shape index: {}]
  %s1 = inlined_call_operand.<no memory space> [shape: f32[1,1], index: 1, kind: input, shape index: {}]
  %s2 = inlined_call_operand.hbm [shape: bf16[128,128], index: 2, kind: input, shape index: {}]
  %s3 = inlined_call_operand.vmem [shape: f32[1,128], index: 3, kind: input, shape index: {}]
  %s4 = inlined_call_operand.hbm [shape: bf16[128,128], index: 4, kind: input, shape index: {}]
  %s5 = inlined_call_operand.vmem [shape: f32[1,128], index: 5, kind: input, shape index: {}]
  %s6 = inlined_call_operand.hbm [shape: bf16[128,128], index: 6, kind: input, shape index: {}]
  %s7 = inlined_call_operand.vmem [shape: f32[1,128], index: 7, kind: input, shape index: {}]
  %s8 = inlined_call_operand.hbm [shape: f32[64,128], index: 8, kind: output, shape index: {}]
  %s9 = sld [smem:[#allocation0]]
  $region58: #{tpu_custom_call.1} parent=0
    _
  %s11 = ssub.s32 1, %s9
  %s12 = scalar_select 0, %s11, %s9
  %13 = sst [smem:[#allocation2]] %s1
  $region1: #{tpu_custom_call.1} parent=0
    #allocation3 [shape = 'u8[32768]{0}', space=vmem, size = 0x8000, scoped, tag = 'input window, operand 0, single buffered']
    #allocation4 [shape = 's32[1]{0}', space=sflag, size = 0x4, scoped, tag = 'scoped memory for tpu_custom_call.1']
    #allocation5 [shape = 's32[1]{0}', space=sflag, size = 0x4, scoped, tag = 'scoped memory for tpu_custom_call.1']
    #allocation6 [shape = 'u8[32768]{0}', space=vmem, size = 0x8000, scoped, tag = 'input window, operand 2, single buffered']
    #allocation7 [shape = 's32[1]{0}', space=sflag, size = 0x4, scoped, tag = 'scoped memory for tpu_custom_call.1']
    #allocation8 [shape = 'u8[32768]{0}', space=vmem, size = 0x8000, scoped, tag = 'input window, operand 4, single buffered']
    #allocation9 [shape = 'u8[32768]{0}', space=vmem, size = 0x8000, scoped, tag = 'input window, operand 6, single buffered']
    #allocation10 [shape = 's32[1]{0}', space=sflag, size = 0x4, scoped, tag = 'scoped memory for tpu_custom_call.1']
    #allocation11 [shape = 'u8[32768]{0}', space=vmem, size = 0x8000, scoped, tag = 'output window, operand 0, single buffered']
    %14 = vsyncpa [#allocation4], 0
    %15 = vsyncpa [#allocation7], 0
    %16 = vsyncpa [#allocation10], 0
    %17 = vsyncpa [#allocation5], 0
    // Predicated region
    $region2: #{tpu_custom_call.1} parent=1 // pred_check
      _
    $region3: #{tpu_custom_call.1} parent=1 // pred_check_branch
      %19 = sbr.rel (0) target = $region5
    $region4: #{tpu_custom_call.1} parent=1 // pred_region
      %s21 = ssub.s32 1024, 1024
      %22 = vsyncadd [#allocation4], %s21
      %s23 = sshll.u32 [#allocation3], 4
      %s24 = int_to_ptr.vmem [resolvable:$true] %s23
      %29 = dma.hbm_to_vmem [thread:$0]  %s0, 1024, %s24, [#allocation4], 128, 128, 8
    $region5: #{tpu_custom_call.1} parent=1 // pred_fallthru
      _
    // Predicated region
    $region6: #{tpu_custom_call.1} parent=1 // pred_check
      _
    $region7: #{tpu_custom_call.1} parent=1 // pred_check_branch
      %31 = sbr.rel (0) target = $region9
    $region8: #{tpu_custom_call.1} parent=1 // pred_region
      _
    $region9: #{tpu_custom_call.1} parent=1 // pred_fallthru
      _
    // Predicated region
    $region10: #{tpu_custom_call.1} parent=1 // pred_check
      _
    $region11: #{tpu_custom_call.1} parent=1 // pred_check_branch
      %33 = sbr.rel (0) target = $region13
    $region12: #{tpu_custom_call.1} parent=1 // pred_region
      %s35 = ssub.s32 1024, 1024
      %36 = vsyncadd [#allocation7], %s35
      %s37 = sshll.u32 [#allocation6], 4
      %s38 = int_to_ptr.vmem [resolvable:$true] %s37
      %43 = dma.hbm_to_vmem [thread:$0]  %s2, 1024, %s38, [#allocation7], 64, 64, 4
    $region13: #{tpu_custom_call.1} parent=1 // pred_fallthru
      _
    // Predicated region
    $region14: #{tpu_custom_call.1} parent=1 // pred_check
      _
    $region15: #{tpu_custom_call.1} parent=1 // pred_check_branch
      %45 = sbr.rel (0) target = $region17
    $region16: #{tpu_custom_call.1} parent=1 // pred_region
      _
    $region17: #{tpu_custom_call.1} parent=1 // pred_fallthru
      _
    // Predicated region
    $region18: #{tpu_custom_call.1} parent=1 // pred_check
      _
    $region19: #{tpu_custom_call.1} parent=1 // pred_check_branch
      %47 = sbr.rel (0) target = $region21
    $region20: #{tpu_custom_call.1} parent=1 // pred_region
      %s49 = ssub.s32 1024, 1024
      %50 = vsyncadd [#allocation7], %s49
      %s51 = sshll.u32 [#allocation8], 4
      %s52 = int_to_ptr.vmem [resolvable:$true] %s51
      %57 = dma.hbm_to_vmem [thread:$0]  %s4, 1024, %s52, [#allocation7], 64, 64, 4
    $region21: #{tpu_custom_call.1} parent=1 // pred_fallthru
      _
    // Predicated region
    $region22: #{tpu_custom_call.1} parent=1 // pred_check
      _
    $region23: #{tpu_custom_call.1} parent=1 // pred_check_branch
      %59 = sbr.rel (0) target = $region25
    $region24: #{tpu_custom_call.1} parent=1 // pred_region
      _
    $region25: #{tpu_custom_call.1} parent=1 // pred_fallthru
      _
    // Predicated region
    $region26: #{tpu_custom_call.1} parent=1 // pred_check
      _
    $region27: #{tpu_custom_call.1} parent=1 // pred_check_branch
      %61 = sbr.rel (0) target = $region29
    $region28: #{tpu_custom_call.1} parent=1 // pred_region
      %s63 = ssub.s32 1024, 1024
      %64 = vsyncadd [#allocation10], %s63
      %s65 = sshll.u32 [#allocation9], 4
      %s66 = int_to_ptr.vmem [resolvable:$true] %s65
      %71 = dma.hbm_to_vmem [thread:$0]  %s6, 1024, %s66, [#allocation10], 64, 64, 4
    $region29: #{tpu_custom_call.1} parent=1 // pred_fallthru
      _
    // Predicated region
    $region30: #{tpu_custom_call.1} parent=1 // pred_check
      _
    $region31: #{tpu_custom_call.1} parent=1 // pred_check_branch
      %73 = sbr.rel (0) target = $region33
    $region32: #{tpu_custom_call.1} parent=1 // pred_region
      _
    $region33: #{tpu_custom_call.1} parent=1 // pred_fallthru
      _
    // Predicated region
    $region34: #{tpu_custom_call.1} parent=1 // pred_check
      _
    $region35: #{tpu_custom_call.1} parent=1 // pred_check_branch
      %75 = sbr.rel (0) target = $region37
    $region36: #{tpu_custom_call.1} parent=1 // pred_region
      %76 = dma.done [#allocation4], 1024
    $region37: #{tpu_custom_call.1} parent=1 // pred_fallthru
      _
    // Predicated region
    $region38: #{tpu_custom_call.1} parent=1 // pred_check
      _
    $region39: #{tpu_custom_call.1} parent=1 // pred_check_branch
      %78 = sbr.rel (0) target = $region41
    $region40: #{tpu_custom_call.1} parent=1 // pred_region
      %79 = dma.done [#allocation7], 1024
    $region41: #{tpu_custom_call.1} parent=1 // pred_fallthru
      _
    // Predicated region
    $region42: #{tpu_custom_call.1} parent=1 // pred_check
      _
    $region43: #{tpu_custom_call.1} parent=1 // pred_check_branch
      %81 = sbr.rel (0) target = $region45
    $region44: #{tpu_custom_call.1} parent=1 // pred_region
      %82 = dma.done [#allocation7], 1024
    $region45: #{tpu_custom_call.1} parent=1 // pred_fallthru
      _
    // Predicated region
    $region46: #{tpu_custom_call.1} parent=1 // pred_check
      _
    $region47: #{tpu_custom_call.1} parent=1 // pred_check_branch
      %84 = sbr.rel (0) target = $region49
    $region48: #{tpu_custom_call.1} parent=1 // pred_region
      %85 = dma.done [#allocation10], 1024
    $region49: #{tpu_custom_call.1} parent=1 // pred_fallthru
      _
    %s87 = sld [smem:[#allocation2]]
    %v88 = vld [vmem:[#allocation3] sm:$0xff]
    %v89 = vld [vmem:[#allocation3 + $0x8] sm:$0xff]
    %v90 = vld [vmem:[#allocation3 + $0x10] sm:$0xff]
    %v91 = vld [vmem:[#allocation3 + $0x18] sm:$0xff]
    %v92 = vld [vmem:[#allocation3 + $0x20] sm:$0xff]
    %v93 = vld [vmem:[#allocation3 + $0x28] sm:$0xff]
    %v94 = vld [vmem:[#allocation3 + $0x30] sm:$0xff]
    %v95 = vld [vmem:[#allocation3 + $0x38] sm:$0xff]
    %v96 = vpack.c.bf16 %v89, %v88
    %v97 = vpack.c.bf16 %v91, %v90
    %v98 = vpack.c.bf16 %v93, %v92
    %v99 = vpack.c.bf16 %v95, %v94
    %v100 = vld [vmem:[#allocation6] sm:$0xf]
    %v101 = vld [vmem:[#allocation6 + $0x4] sm:$0xf]
    %v102 = vld [vmem:[#allocation6 + $0x8] sm:$0xf]
    %v103 = vld [vmem:[#allocation6 + $0xc] sm:$0xf]
    %v104 = vld [vmem:[#allocation6 + $0x10] sm:$0xf]
    %v105 = vld [vmem:[#allocation6 + $0x14] sm:$0xf]
    %v106 = vld [vmem:[#allocation6 + $0x18] sm:$0xf]
    %v107 = vld [vmem:[#allocation6 + $0x1c] sm:$0xf]
    %v108 = vld [vmem:[#allocation6 + $0x20] sm:$0xf]
    %v109 = vld [vmem:[#allocation6 + $0x24] sm:$0xf]
    %v110 = vld [vmem:[#allocation6 + $0x28] sm:$0xf]
    %v111 = vld [vmem:[#allocation6 + $0x2c] sm:$0xf]
    %v112 = vld [vmem:[#allocation6 + $0x30] sm:$0xf]
    %v113 = vld [vmem:[#allocation6 + $0x34] sm:$0xf]
    %v114 = vld [vmem:[#allocation6 + $0x38] sm:$0xf]
    %v115 = vld [vmem:[#allocation6 + $0x3c] sm:$0xf]
    %v116 = vld [vmem:[%s3] sm:$0x1]
    %v118 = vlaneseq
    %v119 = vshrl.u32 %v118, 7
    %v120 = vsub.s32 0, %v119
    %v121 = vrot.slane %v116, %v120
    %v139 = vunpack.c.l.b16 %v100
    %v140 = vunpack.c.l.b16 %v101
    %v141 = vunpack.c.l.b16 %v102
    %v142 = vunpack.c.l.b16 %v103
    %v143 = vunpack.c.l.b16 %v104
    %v144 = vunpack.c.l.b16 %v105
    %v145 = vunpack.c.l.b16 %v106
    %v146 = vunpack.c.l.b16 %v107
    %v147 = vunpack.c.l.b16 %v108
    %v148 = vunpack.c.l.b16 %v109
    %v149 = vunpack.c.l.b16 %v110
    %v150 = vunpack.c.l.b16 %v111
    %v151 = vunpack.c.l.b16 %v112
    %v152 = vunpack.c.l.b16 %v113
    %v153 = vunpack.c.l.b16 %v114
    %v154 = vunpack.c.l.b16 %v115
    %v155 = vpack.c.b16 %v140, %v139
    %v156 = vpack.c.b16 %v142, %v141
    %v157 = vpack.c.b16 %v144, %v143
    %v158 = vpack.c.b16 %v146, %v145
    %v159 = vpack.c.b16 %v148, %v147
    %v160 = vpack.c.b16 %v150, %v149
    %v161 = vpack.c.b16 %v152, %v151
    %v162 = vpack.c.b16 %v154, %v153
    %171 = vmatprep.subr.bf16.mxu0 0
    %172 = vmatpush1.bf16.msra.mxu0 %v155
    %173 = vmatprep.subr.bf16.mxu0 0
    %174 = vmatpush1.bf16.msra.mxu0 %v156
    %175 = vmatprep.subr.bf16.mxu0 0
    %176 = vmatpush1.bf16.msra.mxu0 %v157
    %177 = vmatprep.subr.bf16.mxu0 0
    %178 = vmatpush1.bf16.msra.mxu0 %v158
    %179 = vmatprep.subr.bf16.mxu0 0
    %180 = vmatpush1.bf16.msra.mxu0 %v159
    %181 = vmatprep.subr.bf16.mxu0 0
    %182 = vmatpush1.bf16.msra.mxu0 %v160
    %183 = vmatprep.subr.bf16.mxu0 0
    %184 = vmatpush1.bf16.msra.mxu0 %v161
    %185 = vmatprep.subr.bf16.mxu0 0
    %186 = vmatpush1.bf16.msra.mxu0 %v162
    %187 = vmatprep.subr.bf16.mxu0 0
    %188 = vmatpush1.bf16.msra.mxu0 0
    %189 = vmatprep.subr.bf16.mxu0 0
    %190 = vmatpush1.bf16.msra.mxu0 0
    %191 = vmatprep.subr.bf16.mxu0 0
    %192 = vmatpush1.bf16.msra.mxu0 0
    %193 = vmatprep.subr.bf16.mxu0 0
    %194 = vmatpush1.bf16.msra.mxu0 0
    %195 = vmatprep.subr.bf16.mxu0 0
    %196 = vmatpush1.bf16.msra.mxu0 0
    %197 = vmatprep.subr.bf16.mxu0 0
    %198 = vmatpush1.bf16.msra.mxu0 0
    %199 = vmatprep.subr.bf16.mxu0 0
    %200 = vmatpush1.bf16.msra.mxu0 0
    %201 = vmatprep.subr.bf16.mxu0 0
    %202 = vmatpush1.bf16.msra.mxu0 0
    %203 = vmatprep.mubr.bf16.mxu0 0
    %204 = vmatmul.mubr.bf16.gmra.mrb[0].mxu0 %v96
    %v205 = vpop.f32.mrb[0].mxu0
    %v206 = vadd.f32 %v121, %v205
    %v207 = vpop.f32.mrb[0].mxu0
    %v208 = vpop.f32.mrb[0].mxu0
    %v209 = vadd.f32 %v121, %v208
    %v210 = vpop.f32.mrb[0].mxu0
    %211 = vmatprep.mubr.bf16.mxu0 0
    %212 = vmatmul.mubr.bf16.gmra.mrb[0].mxu0 %v97
    %v213 = vpop.f32.mrb[0].mxu0
    %v214 = vadd.f32 %v121, %v213
    %v215 = vpop.f32.mrb[0].mxu0
    %v216 = vpop.f32.mrb[0].mxu0
    %v217 = vadd.f32 %v121, %v216
    %v218 = vpop.f32.mrb[0].mxu0
    %219 = vmatprep.mubr.bf16.mxu0 0
    %220 = vmatmul.mubr.bf16.gmra.mrb[0].mxu0 %v98
    %v221 = vpop.f32.mrb[0].mxu0
    %v222 = vadd.f32 %v121, %v221
    %v223 = vpop.f32.mrb[0].mxu0
    %v224 = vpop.f32.mrb[0].mxu0
    %v225 = vadd.f32 %v121, %v224
    %v226 = vpop.f32.mrb[0].mxu0
    %227 = vmatprep.mubr.bf16.mxu0 0
    %228 = vmatmul.mubr.bf16.gmra.mrb[0].mxu0 %v99
    %v229 = vpop.f32.mrb[0].mxu0
    %v230 = vadd.f32 %v121, %v229
    %v231 = vpop.f32.mrb[0].mxu0
    %v232 = vpop.f32.mrb[0].mxu0
    %v233 = vadd.f32 %v121, %v232
    %v234 = vpop.f32.mrb[0].mxu0
    %235 = vdwg.mxu0
    %v236 = vmax.f32 %v206, 0.0
    %v237 = vmax.f32 %v209, 0.0
    %v238 = vmax.f32 %v214, 0.0
    %v239 = vmax.f32 %v217, 0.0
    %v240 = vmax.f32 %v222, 0.0
    %v241 = vmax.f32 %v225, 0.0
    %v242 = vmax.f32 %v230, 0.0
    %v243 = vmax.f32 %v233, 0.0
    %v244 = vstv %s87
    %v245 = vmul.f32 %v236, %v244
    %v246 = vmul.f32 %v237, %v244
    %v247 = vmul.f32 %v238, %v244
    %v248 = vmul.f32 %v239, %v244
    %v249 = vmul.f32 %v240, %v244
    %v250 = vmul.f32 %v241, %v244
    %v251 = vmul.f32 %v242, %v244
    %v252 = vmul.f32 %v243, %v244
    %v253 = vpack.c.bf16 %v246, %v245
    %v254 = vpack.c.bf16 %v248, %v247
    %v255 = vpack.c.bf16 %v250, %v249
    %v256 = vpack.c.bf16 %v252, %v251
    %v257 = vld [vmem:[#allocation8] sm:$0xf]
    %v258 = vld [vmem:[#allocation8 + $0x4] sm:$0xf]
    %v259 = vld [vmem:[#allocation8 + $0x8] sm:$0xf]
    %v260 = vld [vmem:[#allocation8 + $0xc] sm:$0xf]
    %v261 = vld [vmem:[#allocation8 + $0x10] sm:$0xf]
    %v262 = vld [vmem:[#allocation8 + $0x14] sm:$0xf]
    %v263 = vld [vmem:[#allocation8 + $0x18] sm:$0xf]
    %v264 = vld [vmem:[#allocation8 + $0x1c] sm:$0xf]
    %v265 = vld [vmem:[#allocation8 + $0x20] sm:$0xf]
    %v266 = vld [vmem:[#allocation8 + $0x24] sm:$0xf]
    %v267 = vld [vmem:[#allocation8 + $0x28] sm:$0xf]
    %v268 = vld [vmem:[#allocation8 + $0x2c] sm:$0xf]
    %v269 = vld [vmem:[#allocation8 + $0x30] sm:$0xf]
    %v270 = vld [vmem:[#allocation8 + $0x34] sm:$0xf]
    %v271 = vld [vmem:[#allocation8 + $0x38] sm:$0xf]
    %v272 = vld [vmem:[#allocation8 + $0x3c] sm:$0xf]
    %v273 = vld [vmem:[%s5] sm:$0x1]
    %v275 = vlaneseq
    %v276 = vshrl.u32 %v275, 7
    %v277 = vsub.s32 0, %v276
    %v278 = vrot.slane %v273, %v277
    %v296 = vunpack.c.l.b16 %v257
    %v297 = vunpack.c.l.b16 %v258
    %v298 = vunpack.c.l.b16 %v259
    %v299 = vunpack.c.l.b16 %v260
    %v300 = vunpack.c.l.b16 %v261
    %v301 = vunpack.c.l.b16 %v262
    %v302 = vunpack.c.l.b16 %v263
    %v303 = vunpack.c.l.b16 %v264
    %v304 = vunpack.c.l.b16 %v265
    %v305 = vunpack.c.l.b16 %v266
    %v306 = vunpack.c.l.b16 %v267
    %v307 = vunpack.c.l.b16 %v268
    %v308 = vunpack.c.l.b16 %v269
    %v309 = vunpack.c.l.b16 %v270
    %v310 = vunpack.c.l.b16 %v271
    %v311 = vunpack.c.l.b16 %v272
    %v312 = vpack.c.b16 %v297, %v296
    %v313 = vpack.c.b16 %v299, %v298
    %v314 = vpack.c.b16 %v301, %v300
    %v315 = vpack.c.b16 %v303, %v302
    %v316 = vpack.c.b16 %v305, %v304
    %v317 = vpack.c.b16 %v307, %v306
    %v318 = vpack.c.b16 %v309, %v308
    %v319 = vpack.c.b16 %v311, %v310
    %328 = vmatprep.subr.bf16.mxu0 0
    %329 = vmatpush1.bf16.msra.mxu0 %v312
    %330 = vmatprep.subr.bf16.mxu0 0
    %331 = vmatpush1.bf16.msra.mxu0 %v313
    %332 = vmatprep.subr.bf16.mxu0 0
    %333 = vmatpush1.bf16.msra.mxu0 %v314
    %334 = vmatprep.subr.bf16.mxu0 0
    %335 = vmatpush1.bf16.msra.mxu0 %v315
    %336 = vmatprep.subr.bf16.mxu0 0
    %337 = vmatpush1.bf16.msra.mxu0 %v316
    %338 = vmatprep.subr.bf16.mxu0 0
    %339 = vmatpush1.bf16.msra.mxu0 %v317
    %340 = vmatprep.subr.bf16.mxu0 0
    %341 = vmatpush1.bf16.msra.mxu0 %v318
    %342 = vmatprep.subr.bf16.mxu0 0
    %343 = vmatpush1.bf16.msra.mxu0 %v319
    %344 = vmatprep.subr.bf16.mxu0 0
    %345 = vmatpush1.bf16.msra.mxu0 0
    %346 = vmatprep.subr.bf16.mxu0 0
    %347 = vmatpush1.bf16.msra.mxu0 0
    %348 = vmatprep.subr.bf16.mxu0 0
    %349 = vmatpush1.bf16.msra.mxu0 0
    %350 = vmatprep.subr.bf16.mxu0 0
    %351 = vmatpush1.bf16.msra.mxu0 0
    %352 = vmatprep.subr.bf16.mxu0 0
    %353 = vmatpush1.bf16.msra.mxu0 0
    %354 = vmatprep.subr.bf16.mxu0 0
    %355 = vmatpush1.bf16.msra.mxu0 0
    %356 = vmatprep.subr.bf16.mxu0 0
    %357 = vmatpush1.bf16.msra.mxu0 0
    %358 = vmatprep.subr.bf16.mxu0 0
    %359 = vmatpush1.bf16.msra.mxu0 0
    %360 = vmatprep.mubr.bf16.mxu0 0
    %361 = vmatmul.mubr.bf16.gmra.mrb[0].mxu0 %v253
    %v362 = vpop.f32.mrb[0].mxu0
    %v363 = vadd.f32 %v278, %v362
    %v364 = vpop.f32.mrb[0].mxu0
    %v365 = vpop.f32.mrb[0].mxu0
    %v366 = vadd.f32 %v278, %v365
    %v367 = vpop.f32.mrb[0].mxu0
    %368 = vmatprep.mubr.bf16.mxu0 0
    %369 = vmatmul.mubr.bf16.gmra.mrb[0].mxu0 %v254
    %v370 = vpop.f32.mrb[0].mxu0
    %v371 = vadd.f32 %v278, %v370
    %v372 = vpop.f32.mrb[0].mxu0
    %v373 = vpop.f32.mrb[0].mxu0
    %v374 = vadd.f32 %v278, %v373
    %v375 = vpop.f32.mrb[0].mxu0
    %376 = vmatprep.mubr.bf16.mxu0 0
    %377 = vmatmul.mubr.bf16.gmra.mrb[0].mxu0 %v255
    %v378 = vpop.f32.mrb[0].mxu0
    %v379 = vadd.f32 %v278, %v378
    %v380 = vpop.f32.mrb[0].mxu0
    %v381 = vpop.f32.mrb[0].mxu0
    %v382 = vadd.f32 %v278, %v381
    %v383 = vpop.f32.mrb[0].mxu0
    %384 = vmatprep.mubr.bf16.mxu0 0
    %385 = vmatmul.mubr.bf16.gmra.mrb[0].mxu0 %v256
    %v386 = vpop.f32.mrb[0].mxu0
    %v387 = vadd.f32 %v278, %v386
    %v388 = vpop.f32.mrb[0].mxu0
    %v389 = vpop.f32.mrb[0].mxu0
    %v390 = vadd.f32 %v278, %v389
    %v391 = vpop.f32.mrb[0].mxu0
    %392 = vdwg.mxu0
    %v393 = vmax.f32 %v363, 0.0
    %v394 = vmax.f32 %v366, 0.0
    %v395 = vmax.f32 %v371, 0.0
    %v396 = vmax.f32 %v374, 0.0
    %v397 = vmax.f32 %v379, 0.0
    %v398 = vmax.f32 %v382, 0.0
    %v399 = vmax.f32 %v387, 0.0
    %v400 = vmax.f32 %v390, 0.0
    %v401 = vmul.f32 %v393, %v244
    %v402 = vmul.f32 %v394, %v244
    %v403 = vmul.f32 %v395, %v244
    %v404 = vmul.f32 %v396, %v244
    %v405 = vmul.f32 %v397, %v244
    %v406 = vmul.f32 %v398, %v244
    %v407 = vmul.f32 %v399, %v244
    %v408 = vmul.f32 %v400, %v244
    %v409 = vpack.c.bf16 %v402, %v401
    %v410 = vpack.c.bf16 %v404, %v403
    %v411 = vpack.c.bf16 %v406, %v405
    %v412 = vpack.c.bf16 %v408, %v407
    %v413 = vld [vmem:[#allocation9] sm:$0xf]
    %v414 = vld [vmem:[#allocation9 + $0x4] sm:$0xf]
    %v415 = vld [vmem:[#allocation9 + $0x8] sm:$0xf]
    %v416 = vld [vmem:[#allocation9 + $0xc] sm:$0xf]
    %v417 = vld [vmem:[#allocation9 + $0x10] sm:$0xf]
    %v418 = vld [vmem:[#allocation9 + $0x14] sm:$0xf]
    %v419 = vld [vmem:[#allocation9 + $0x18] sm:$0xf]
    %v420 = vld [vmem:[#allocation9 + $0x1c] sm:$0xf]
    %v421 = vld [vmem:[#allocation9 + $0x20] sm:$0xf]
    %v422 = vld [vmem:[#allocation9 + $0x24] sm:$0xf]
    %v423 = vld [vmem:[#allocation9 + $0x28] sm:$0xf]
    %v424 = vld [vmem:[#allocation9 + $0x2c] sm:$0xf]
    %v425 = vld [vmem:[#allocation9 + $0x30] sm:$0xf]
    %v426 = vld [vmem:[#allocation9 + $0x34] sm:$0xf]
    %v427 = vld [vmem:[#allocation9 + $0x38] sm:$0xf]
    %v428 = vld [vmem:[#allocation9 + $0x3c] sm:$0xf]
    %v429 = vld [vmem:[%s7] sm:$0x1]
    %v431 = vlaneseq
    %v432 = vshrl.u32 %v431, 7
    %v433 = vsub.s32 0, %v432
    %v434 = vrot.slane %v429, %v433
    %v452 = vunpack.c.l.b16 %v413
    %v453 = vunpack.c.l.b16 %v414
    %v454 = vunpack.c.l.b16 %v415
    %v455 = vunpack.c.l.b16 %v416
    %v456 = vunpack.c.l.b16 %v417
    %v457 = vunpack.c.l.b16 %v418
    %v458 = vunpack.c.l.b16 %v419
    %v459 = vunpack.c.l.b16 %v420
    %v460 = vunpack.c.l.b16 %v421
    %v461 = vunpack.c.l.b16 %v422
    %v462 = vunpack.c.l.b16 %v423
    %v463 = vunpack.c.l.b16 %v424
    %v464 = vunpack.c.l.b16 %v425
    %v465 = vunpack.c.l.b16 %v426
    %v466 = vunpack.c.l.b16 %v427
    %v467 = vunpack.c.l.b16 %v428
    %v468 = vpack.c.b16 %v453, %v452
    %v469 = vpack.c.b16 %v455, %v454
    %v470 = vpack.c.b16 %v457, %v456
    %v471 = vpack.c.b16 %v459, %v458
    %v472 = vpack.c.b16 %v461, %v460
    %v473 = vpack.c.b16 %v463, %v462
    %v474 = vpack.c.b16 %v465, %v464
    %v475 = vpack.c.b16 %v467, %v466
    %484 = vmatprep.subr.bf16.mxu0 0
    %485 = vmatpush1.bf16.msra.mxu0 %v468
    %486 = vmatprep.subr.bf16.mxu0 0
    %487 = vmatpush1.bf16.msra.mxu0 %v469
    %488 = vmatprep.subr.bf16.mxu0 0
    %489 = vmatpush1.bf16.msra.mxu0 %v470
    %490 = vmatprep.subr.bf16.mxu0 0
    %491 = vmatpush1.bf16.msra.mxu0 %v471
    %492 = vmatprep.subr.bf16.mxu0 0
    %493 = vmatpush1.bf16.msra.mxu0 %v472
    %494 = vmatprep.subr.bf16.mxu0 0
    %495 = vmatpush1.bf16.msra.mxu0 %v473
    %496 = vmatprep.subr.bf16.mxu0 0
    %497 = vmatpush1.bf16.msra.mxu0 %v474
    %498 = vmatprep.subr.bf16.mxu0 0
    %499 = vmatpush1.bf16.msra.mxu0 %v475
    %500 = vmatprep.subr.bf16.mxu0 0
    %501 = vmatpush1.bf16.msra.mxu0 0
    %502 = vmatprep.subr.bf16.mxu0 0
    %503 = vmatpush1.bf16.msra.mxu0 0
    %504 = vmatprep.subr.bf16.mxu0 0
    %505 = vmatpush1.bf16.msra.mxu0 0
    %506 = vmatprep.subr.bf16.mxu0 0
    %507 = vmatpush1.bf16.msra.mxu0 0
    %508 = vmatprep.subr.bf16.mxu0 0
    %509 = vmatpush1.bf16.msra.mxu0 0
    %510 = vmatprep.subr.bf16.mxu0 0
    %511 = vmatpush1.bf16.msra.mxu0 0
    %512 = vmatprep.subr.bf16.mxu0 0
    %513 = vmatpush1.bf16.msra.mxu0 0
    %514 = vmatprep.subr.bf16.mxu0 0
    %515 = vmatpush1.bf16.msra.mxu0 0
    %516 = vmatprep.mubr.bf16.mxu0 0
    %517 = vmatmul.mubr.bf16.gmra.mrb[0].mxu0 %v409
    %v518 = vpop.f32.mrb[0].mxu0
    %v519 = vadd.f32 %v434, %v518
    %v520 = vpop.f32.mrb[0].mxu0
    %v521 = vpop.f32.mrb[0].mxu0
    %v522 = vadd.f32 %v434, %v521
    %v523 = vpop.f32.mrb[0].mxu0
    %524 = vmatprep.mubr.bf16.mxu0 0
    %525 = vmatmul.mubr.bf16.gmra.mrb[0].mxu0 %v410
    %v526 = vpop.f32.mrb[0].mxu0
    %v527 = vadd.f32 %v434, %v526
    %v528 = vpop.f32.mrb[0].mxu0
    %v529 = vpop.f32.mrb[0].mxu0
    %v530 = vadd.f32 %v434, %v529
    %v531 = vpop.f32.mrb[0].mxu0
    %532 = vmatprep.mubr.bf16.mxu0 0
    %533 = vmatmul.mubr.bf16.gmra.mrb[0].mxu0 %v411
    %v534 = vpop.f32.mrb[0].mxu0
    %v535 = vadd.f32 %v434, %v534
    %v536 = vpop.f32.mrb[0].mxu0
    %v537 = vpop.f32.mrb[0].mxu0
    %v538 = vadd.f32 %v434, %v537
    %v539 = vpop.f32.mrb[0].mxu0
    %540 = vmatprep.mubr.bf16.mxu0 0
    %541 = vmatmul.mubr.bf16.gmra.mrb[0].mxu0 %v412
    %v542 = vpop.f32.mrb[0].mxu0
    %v543 = vadd.f32 %v434, %v542
    %v544 = vpop.f32.mrb[0].mxu0
    %v545 = vpop.f32.mrb[0].mxu0
    %v546 = vadd.f32 %v434, %v545
    %v547 = vpop.f32.mrb[0].mxu0
    %548 = vdwg.mxu0
    %549 = vst [vmem:[#allocation11] sm:$0xff] %v519
    %550 = vst [vmem:[#allocation11 + $0x8] sm:$0xff] %v522
    %551 = vst [vmem:[#allocation11 + $0x10] sm:$0xff] %v527
    %552 = vst [vmem:[#allocation11 + $0x18] sm:$0xff] %v530
    %553 = vst [vmem:[#allocation11 + $0x20] sm:$0xff] %v535
    %554 = vst [vmem:[#allocation11 + $0x28] sm:$0xff] %v538
    %555 = vst [vmem:[#allocation11 + $0x30] sm:$0xff] %v543
    %556 = vst [vmem:[#allocation11 + $0x38] sm:$0xff] %v546
    // Predicated region
    $region50: #{tpu_custom_call.1} parent=1 // pred_check
      _
    $region51: #{tpu_custom_call.1} parent=1 // pred_check_branch
      %558 = sbr.rel (0) target = $region53
    $region52: #{tpu_custom_call.1} parent=1 // pred_region
      %s560 = ssub.s32 1024, 1024
      %561 = vsyncadd [#allocation5], %s560
      %s562 = sshll.u32 [#allocation11], 4
      %s563 = int_to_ptr.vmem [resolvable:$true] %s562
      %568 = dma.vmem_to_hbm [thread:$0]  %s563, 1024, %s8, [#allocation5], 128, 128, 8
    $region53: #{tpu_custom_call.1} parent=1 // pred_fallthru
      _
    // Predicated region
    $region54: #{tpu_custom_call.1} parent=1 // pred_check
      _
    $region55: #{tpu_custom_call.1} parent=1 // pred_check_branch
      %570 = sbr.rel (0) target = $region57
    $region56: #{tpu_custom_call.1} parent=1 // pred_region
      %571 = dma.done [#allocation5], 1024
    $region57: #{tpu_custom_call.1} parent=1 // pred_fallthru
      _
    %572 = vsyncpa [#allocation4], 1
    %573 = vsyncpa [#allocation7], 1
    %574 = vsyncpa [#allocation10], 1
    %575 = vsyncpa [#allocation5], 1

</llo_original>
